<compile_context>
chip_gen: v6e
topology: v6e:2x2x1
jax: 0.10.0
libtpu: 0.0.40
codegen_flags: <defaults>
</compile_context>

<pallas_src>
import functools

import jax
import jax.numpy as jnp
from jax.experimental import pallas as pl
from jax.experimental.pallas import tpu as pltpu


# --------------------------------------------------------------------------- #
# Kernels
# --------------------------------------------------------------------------- #
def _logits_kernel_f32out(x_ref, w_ref, b_ref, o_ref, *, scale, compute_dtype):
    """fp32 output: accumulate directly into the K-resident output block."""
    k = pl.program_id(2)

    @pl.when(k == 0)
    def _():
        o_ref[...] = jnp.zeros_like(o_ref)

    o_ref[...] += jnp.dot(
        x_ref[...].astype(compute_dtype),
        w_ref[...].astype(compute_dtype),
        preferred_element_type=jnp.float32,
    )

    @pl.when(k == pl.num_programs(2) - 1)
    def _():
        # scale + bias epilogue, once per output tile.
        o_ref[...] = o_ref[...] * scale + b_ref[...].astype(jnp.float32)


def _logits_kernel_acc(x_ref, w_ref, b_ref, o_ref, acc_ref, *, scale,
                       compute_dtype):
    """Non-f32 output: fp32 VMEM scratch accumulator, cast in the epilogue."""
    k = pl.program_id(2)

    @pl.when(k == 0)
    def _():
        acc_ref[...] = jnp.zeros_like(acc_ref)

    acc_ref[...] += jnp.dot(
        x_ref[...].astype(compute_dtype),
        w_ref[...].astype(compute_dtype),
        preferred_element_type=jnp.float32,
    )

    @pl.when(k == pl.num_programs(2) - 1)
    def _():
        o_ref[...] = (
            acc_ref[...] * scale + b_ref[...].astype(jnp.float32)
        ).astype(o_ref.dtype)


# --------------------------------------------------------------------------- #
# Tiling helpers
# --------------------------------------------------------------------------- #
def _round_up(x, m):
    return (x + m - 1) // m * m


def _pick_tile(dim, cap, align):
    """Largest tile <= cap that divides `dim` and is `align`-aligned.

    Returns `dim` itself when dim <= cap (full-extent blocks are always legal).
    Returns None if no aligned divisor exists (caller falls back to padding).
    """
    if dim <= cap:
        return dim
    t = (cap // align) * align
    while t >= align:
        if dim % t == 0:
            return t
        t -= align
    return None


def _vmem_footprint(tm, tk, tv, x_isz, w_isz, b_isz, o_isz, use_acc,
                    w_buffers):
    """Double-buffered VMEM bytes for one pipeline stage."""
    f = 2 * tm * tk * x_isz          # x tiles (double-buffered)
    f += w_buffers * tk * tv * w_isz  # W tiles
    f += 2 * tv * b_isz               # bias tiles
    f += 2 * tm * tv * o_isz          # output tiles
    if use_acc:
        f += tm * tv * 4              # fp32 scratch accumulator
    return f


# --------------------------------------------------------------------------- #
# Wrapper
# --------------------------------------------------------------------------- #
def logits_forward(x, w, b, *, tm=None, tv=None, tk=None,
                   compute_dtype=jnp.bfloat16,
                   vmem_budget_bytes=40 * 1024 * 1024,
                   w_buffers=2):
    """logits = x @ w / sqrt(num_neurons) + b, computed with a Pallas kernel."""
    M, K = x.shape               # (batch, numNeurons)
    K2, V = w.shape              # (numNeurons, vocabSize)
    assert K == K2 and b.shape == (V,)
    scale = 1.0 / (float(K) ** 0.5)   # scale uses the *original* numNeurons
    out_dtype = x.dtype
    use_acc = out_dtype != jnp.float32

    x_isz = jnp.dtype(x.dtype).itemsize
    w_isz = jnp.dtype(w.dtype).itemsize
    b_isz = jnp.dtype(b.dtype).itemsize
    o_isz = jnp.dtype(out_dtype).itemsize

    # --- tile selection -------------------------------------------------------
    # Prefer divisors of the true dims (no HBM-side padding copy of W); caps are
    # big enough to amortize the ~0.35us/step grid overhead and minimize W
    # re-streams, while the budget loop keeps the footprint v7x-safe (64 MiB).
    user_tm, user_tk, user_tv = tm, tk, tv
    tm_cap, tk_cap, tv_cap = 512, 1024, 2048

    def _select(cap_m, cap_k, cap_v):
        sm = user_tm if user_tm is not None else (
            _pick_tile(M, cap_m, 8) or min(cap_m, _round_up(M, 8)))
        sk = user_tk if user_tk is not None else (
            _pick_tile(K, cap_k, 128) or min(cap_k, _round_up(K, 128)))
        sv = user_tv if user_tv is not None else (
            _pick_tile(V, cap_v, 128) or min(cap_v, _round_up(V, 128)))
        return sm, sk, sv

    tm, tk, tv = _select(tm_cap, tk_cap, tv_cap)
    for _ in range(8):
        if _vmem_footprint(tm, tk, tv, x_isz, w_isz, b_isz, o_isz, use_acc,
                           max(2, w_buffers)) <= vmem_budget_bytes:
            break
        if user_tv is None and tv_cap > 256:
            tv_cap //= 2          # W / output lane dim is the biggest consumer
        elif user_tk is None and tk_cap > 256:
            tk_cap //= 2
        elif user_tm is None and tm_cap > 64:
            tm_cap //= 2
        else:
            break
        tm, tk, tv = _select(tm_cap, tk_cap, tv_cap)

    # Megacore / v7x 2-TC: never collapse both parallel axes to a single block.
    if (user_tv is None and (M + tm - 1) // tm == 1
            and (V + tv - 1) // tv == 1 and V >= 256):
        half_cap = max(128, (V // 2) // 128 * 128)
        tv_split = _pick_tile(V, half_cap, 128)
        if tv_split is not None and tv_split < V:
            tv = tv_split

    # --- padding (fallback only; divisor-based tiles avoid it) ----------------
    Mp, Kp, Vp = _round_up(M, tm), _round_up(K, tk), _round_up(V, tv)
    if (Mp, Kp) != (M, K):
        x = jnp.pad(x, ((0, Mp - M), (0, Kp - K)))
    if (Kp, Vp) != (K, V):
        w = jnp.pad(w, ((0, Kp - K), (0, Vp - V)))
    if Vp != V:
        b = jnp.pad(b, (0, Vp - V))
    b2d = b.reshape(1, Vp)                # bias as (1, V): lane axis last

    grid = (Mp // tm, Vp // tv, Kp // tk)
    m_tiles, v_tiles = grid[0], grid[1]

    if use_acc:
        kernel = functools.partial(_logits_kernel_acc, scale=scale,
                                   compute_dtype=compute_dtype)
        scratch_shapes = (pltpu.VMEM((tm, tv), jnp.float32),)
    else:
        kernel = functools.partial(_logits_kernel_f32out, scale=scale,
                                   compute_dtype=compute_dtype)
        scratch_shapes = ()

    # Optional extra W buffering for DMA-exposed small-M cases (default off).
    w_spec_kwargs = {}
    if w_buffers is not None and w_buffers > 2:
        w_spec_kwargs = dict(pipeline_mode=pl.Buffered(w_buffers))
    w_spec = pl.BlockSpec((tk, tv), lambda i, j, k: (k, j), **w_spec_kwargs)

    footprint = _vmem_footprint(tm, tk, tv, x_isz, w_isz, b_isz, o_isz,
                                use_acc, max(2, w_buffers))
    vmem_limit_bytes = int(min(max(footprint + (4 << 20), 16 << 20), 96 << 20))

    cost = pl.CostEstimate(
        flops=2 * Mp * Kp * Vp,
        transcendentals=0,
        bytes_accessed=int(x_isz * Mp * Kp * v_tiles      # x re-read per V tile
                           + w_isz * Kp * Vp * m_tiles    # W re-streamed per M tile
                           + b_isz * Vp * m_tiles
                           + o_isz * Mp * Vp),
    )

    out = pl.pallas_call(
        kernel,
        out_shape=jax.ShapeDtypeStruct((Mp, Vp), out_dtype),
        grid_spec=pltpu.PrefetchScalarGridSpec(
            num_scalar_prefetch=0,
            grid=grid,
            in_specs=[
                pl.BlockSpec((tm, tk), lambda i, j, k: (i, k)),   # x tile
                w_spec,                                            # W tile
                pl.BlockSpec((1, tv), lambda i, j, k: (0, j)),    # bias tile
            ],
            out_specs=pl.BlockSpec((tm, tv), lambda i, j, k: (i, j)),
            scratch_shapes=scratch_shapes,
        ),
        compiler_params=pltpu.CompilerParams(
            dimension_semantics=("parallel", "parallel", "arbitrary"),
            vmem_limit_bytes=vmem_limit_bytes,
        ),
        cost_estimate=cost,
    )(x, w, b2d)

    if (Mp, Vp) != (M, V):
        out = out[:M, :V]
    return out


if __name__ == "__main__":
    # Module hyperparameters (the original pulls numNeurons / vocabSize from
    # globals); small deterministic synthetic sizes here.
    batch = 8
    num_neurons = 32
    vocab_size = 256

    key = jax.random.PRNGKey(0)
    kx, kw = jax.random.split(key)

    # Deterministic parameter init (torch.randn -> normal; bias -> zeros).
    l_weights = jax.random.normal(kw, (num_neurons, vocab_size), dtype=jnp.float32)
    l_bias = jnp.zeros((vocab_size,), dtype=jnp.float32)

    # Mean-activations input tensor.
    x = jax.random.normal(kx, (batch, num_neurons), dtype=jnp.float32)

    out = logits_forward(x, l_weights, l_bias)
    jax.block_until_ready(out)
    assert out.shape == (batch, vocab_size)

    scale = 1.0 / num_neurons ** 0.5
    ref_bf16 = (jnp.dot(x.astype(jnp.bfloat16), l_weights.astype(jnp.bfloat16),
                        preferred_element_type=jnp.float32) * scale + l_bias)
    ref_f32 = x @ l_weights * scale + l_bias
    assert jnp.allclose(out, ref_bf16, atol=5e-3, rtol=5e-3)
    assert jnp.allclose(out, ref_f32, atol=5e-2, rtol=5e-2)

    # Second check: exercises multi-tile M/V and K-accumulation (explicit tiles).
    k2 = jax.random.PRNGKey(1)
    ka, kb = jax.random.split(k2)
    x2 = jax.random.normal(ka, (16, 256), dtype=jnp.float32)
    w2 = jax.random.normal(kb, (256, 512), dtype=jnp.float32)
    b2 = jnp.linspace(-1.0, 1.0, 512, dtype=jnp.float32)
    out2 = logits_forward(x2, w2, b2, tm=8, tv=128, tk=128)
    jax.block_until_ready(out2)
    ref2 = (jnp.dot(x2.astype(jnp.bfloat16), w2.astype(jnp.bfloat16),
                    preferred_element_type=jnp.float32) / (256 ** 0.5) + b2)
    assert jnp.allclose(out2, ref2, atol=1e-2, rtol=1e-2)

    # Third check: bf16 inputs -> bf16 output path (VMEM scratch accumulator).
    x3 = x2.astype(jnp.bfloat16)
    w3 = w2.astype(jnp.bfloat16)
    out3 = logits_forward(x3, w3, b2)
    jax.block_until_ready(out3)
    assert out3.dtype == jnp.bfloat16
    assert jnp.allclose(out3.astype(jnp.float32), ref2, atol=1e-1, rtol=1e-1)

    print("KERNEL_OK")
</pallas_src>

<mosaic_0001>
module attributes {stable_mosaic.version = 11 : i64} {
  func.func @_logits_kernel_f32out(%arg0: i32, %arg1: i32, %arg2: i32, %arg3: memref<8x32xf32, #tpu.memory_space<vmem>>, %arg4: memref<32x128xf32, #tpu.memory_space<vmem>>, %arg5: memref<1x128xf32, #tpu.memory_space<vmem>>, %arg6: memref<8x128xf32, #tpu.memory_space<vmem>>) attributes {dimension_semantics = [#tpu.dimension_semantics<parallel>, #tpu.dimension_semantics<parallel>, #tpu.dimension_semantics<arbitrary>], iteration_bounds = array<i64: 1, 2, 1>, scalar_prefetch = 0 : i64, scratch_operands = 0 : i64, tpu.core_type = #tpu.core_type<tc>, window_params = [{transform_indices = @transform_0, window_bounds = array<i64: 8, 32>}, {transform_indices = @transform_1, window_bounds = array<i64: 32, 128>}, {transform_indices = @transform_2, window_bounds = array<i64: 1, 128>}, {transform_indices = @transform_3, window_bounds = array<i64: 8, 128>}]} {
    %c0_i32 = arith.constant 0 : i32
    %0 = arith.cmpi eq, %arg2, %c0_i32 : i32
    %1 = arith.extui %0 : i1 to i32
    %c0_i32_0 = arith.constant 0 : i32
    %2 = arith.cmpi ne, %1, %c0_i32_0 : i32
    scf.if %2 {
      %cst_10 = arith.constant 0.000000e+00 : f32
      %14 = vector.broadcast %cst_10 : f32 to vector<8x128xf32>
      %c0_11 = arith.constant 0 : index
      %c0_12 = arith.constant 0 : index
      %15 = vector.load %arg6[%c0_11, %c0_12] : memref<8x128xf32, #tpu.memory_space<vmem>>, vector<8x128xf32>
      tpu.vector_store %arg6[%c0_11, %c0_12], %14 {strides = array<i32>} : memref<8x128xf32, #tpu.memory_space<vmem>>, vector<8x128xf32>,
    } else {
    }
    %c0 = arith.constant 0 : index
    %c0_1 = arith.constant 0 : index
    %3 = vector.load %arg6[%c0, %c0_1] : memref<8x128xf32, #tpu.memory_space<vmem>>, vector<8x128xf32>
    %c0_2 = arith.constant 0 : index
    %c0_3 = arith.constant 0 : index
    %4 = vector.load %arg3[%c0_2, %c0_3] : memref<8x32xf32, #tpu.memory_space<vmem>>, vector<8x32xf32>
    %5 = arith.truncf %4 : vector<8x32xf32> to vector<8x32xbf16>
    %c0_4 = arith.constant 0 : index
    %c0_5 = arith.constant 0 : index
    %6 = vector.load %arg4[%c0_4, %c0_5] : memref<32x128xf32, #tpu.memory_space<vmem>>, vector<32x128xf32>
    %7 = arith.truncf %6 : vector<32x128xf32> to vector<32x128xbf16>
    %cst = arith.constant dense<0.000000e+00> : vector<8x128xf32>
    %8 = tpu.matmul %5, %7, %cst {dimension_numbers = #tpu.dot_dimension_numbers<[1], [0], [0], [1], [0, 0, 1, 1], [], []>} : vector<8x32xbf16>, vector<32x128xbf16>, vector<8x128xf32> -> vector<8x128xf32>
    %9 = arith.addf %3, %8 : vector<8x128xf32>
    %c0_6 = arith.constant 0 : index
    %c0_7 = arith.constant 0 : index
    %10 = vector.load %arg6[%c0_6, %c0_7] : memref<8x128xf32, #tpu.memory_space<vmem>>, vector<8x128xf32>
    tpu.vector_store %arg6[%c0_6, %c0_7], %9 {strides = array<i32>} : memref<8x128xf32, #tpu.memory_space<vmem>>, vector<8x128xf32>,
    %c0_i32_8 = arith.constant 0 : i32
    %11 = arith.cmpi eq, %arg2, %c0_i32_8 : i32
    %12 = arith.extui %11 : i1 to i32
    %c0_i32_9 = arith.constant 0 : i32
    %13 = arith.cmpi ne, %12, %c0_i32_9 : i32
    scf.if %13 {
      %c0_10 = arith.constant 0 : index
      %c0_11 = arith.constant 0 : index
      %14 = vector.load %arg6[%c0_10, %c0_11] : memref<8x128xf32, #tpu.memory_space<vmem>>, vector<8x128xf32>
      %cst_12 = arith.constant 0.176776692 : f32
      %15 = vector.broadcast %cst_12 : f32 to vector<8x128xf32>
      %16 = arith.mulf %14, %15 : vector<8x128xf32>
      %c0_13 = arith.constant 0 : index
      %c0_14 = arith.constant 0 : index
      %17 = vector.load %arg5[%c0_13, %c0_14] : memref<1x128xf32, #tpu.memory_space<vmem>>, vector<1x128xf32>
      %18 = vector.broadcast %17 : vector<1x128xf32> to vector<8x128xf32>
      %19 = arith.addf %16, %18 : vector<8x128xf32>
      %c0_15 = arith.constant 0 : index
      %c0_16 = arith.constant 0 : index
      %20 = vector.load %arg6[%c0_15, %c0_16] : memref<8x128xf32, #tpu.memory_space<vmem>>, vector<8x128xf32>
      tpu.vector_store %arg6[%c0_15, %c0_16], %19 {strides = array<i32>} : memref<8x128xf32, #tpu.memory_space<vmem>>, vector<8x128xf32>,
    } else {
    }
    return
  }
  func.func @transform_0(%arg0: i32, %arg1: i32, %arg2: i32) -> (i32, i32) {
    %c0_i32 = arith.constant 0 : i32
    return %arg0, %arg2 : i32, i32
  }
  func.func @transform_1(%arg0: i32, %arg1: i32, %arg2: i32) -> (i32, i32) {
    %c0_i32 = arith.constant 0 : i32
    return %arg2, %arg1 : i32, i32
  }
  func.func @transform_2(%arg0: i32, %arg1: i32, %arg2: i32) -> (i32, i32) {
    %c0_i32 = arith.constant 0 : i32
    %c0_i32_0 = arith.constant 0 : i32
    return %c0_i32, %arg1 : i32, i32
  }
  func.func @transform_3(%arg0: i32, %arg1: i32, %arg2: i32) -> (i32, i32) {
    %c0_i32 = arith.constant 0 : i32
    return %arg0, %arg1 : i32, i32
  }
}

</mosaic_0001>

<llo_original>
// kernel: tpu_custom_call.1
$region0: #{tpu_custom_call.1}
  #allocation0 [shape = 'u32[]', space=smem, size = 0x4, offset = 0x4, fixed_abs, tag = 'smem constant byte address 0x4 - core index']
  #allocation1 [shape = 'u32[144,128]{1,0:T(1,128)}', space=vmem, size = 0x12000, scoped, tag = 'internal scratch']
  %s0 = inlined_call_operand.hbm [shape: f32[8,32], index: 0, kind: input, shape index: {}]
  %s1 = inlined_call_operand.hbm [shape: f32[32,256], index: 1, kind: input, shape index: {}]
  %s2 = inlined_call_operand.vmem [shape: f32[1,256], index: 2, kind: input, shape index: {}]
  %s3 = inlined_call_operand.hbm [shape: f32[8,256], index: 3, kind: output, shape index: {}]
  %s4 = sld [smem:[#allocation0]]
  $region61: #{tpu_custom_call.1} parent=0
    _
  %s6 = ssub.s32 1, %s4
  %s7 = scalar_select 0, %s6, %s4
  $region1: #{tpu_custom_call.1} parent=0
    #allocation2 [shape = 'u8[4096]{0}', space=vmem, size = 0x1000, scoped, tag = 'input window, operand 0, single buffered']
    #allocation3 [shape = 's32[2]{0}', space=sflag, size = 0x8, scoped, tag = 'scoped memory for tpu_custom_call.1']
    #allocation4 [shape = 's32[2]{0}', space=sflag, size = 0x8, scoped, tag = 'scoped memory for tpu_custom_call.1']
    #allocation5 [shape = 'u8[32768]{0}', space=vmem, size = 0x8000, scoped, tag = 'input window, operand 1']
    #allocation6 [shape = 's32[2]{0}', space=sflag, size = 0x8, scoped, tag = 'scoped memory for tpu_custom_call.1']
    #allocation7 [shape = 'u8[8192]{0}', space=vmem, size = 0x2000, scoped, tag = 'output window, operand 0']
    %8 = vsyncpa [#allocation3], 0
    %9 = vsyncpa [#allocation6], 0
    %s10 = scalar_lea.sflag [#allocation6], 1
    %11 = vsyncpa %s10, 0
    %12 = vsyncpa [#allocation4], 0
    %s13 = scalar_lea.sflag [#allocation4], 1
    %14 = vsyncpa %s13, 0
    loop: start=0, step=1, limit=4
    $region2: #{tpu_custom_call.1} parent=1 // loop_pre_header
      _
    $region3: #{tpu_custom_call.1} parent=1 // loop_header
      %s16 = sphi 0, %s20
      %p17 = scmp.ge.s32.totalorder %s16, 4
      %s23 = sphi 0, %s42
      %s24 = sphi 0, %s38
      %s25 = sphi 0, %s34
      %s26 = sphi 0, %s23
      %s27 = sphi 0, %s24
      %s28 = sphi 0, %s25
      %s29 = sphi 0, %s26
      %s30 = sphi 0, %s27
      %s31 = sphi 0, %s28
      %s47 = sphi 0, %s49
      %s50 = sphi 0, %s47
      %s51 = sphi 0, %s50
      %s67 = sphi 0, %s51
      %s75 = sphi 0, %s77
      %s78 = sphi 0, %s75
      %s79 = sphi 0, %s78
      %s95 = sphi 0, %s79
      %s101 = sphi 0, %s103
      %s104 = sphi 0, %s101
      %s105 = sphi 0, %s104
      %s121 = sphi 0, %s105
      %s129 = sphi 0, %s131
      %s132 = sphi 0, %s129
      %s133 = sphi 0, %s132
      %s149 = sphi 0, %s133
    $region4: #{tpu_custom_call.1} parent=1 // loop_header_branch
      %19 = sbr.rel (%p17) target = $region8
    $region5: #{tpu_custom_call.1} parent=1 // loop_body
      %s21 = ssub.s32 %s16, 1
      %s22 = ssub.s32 %s16, 2
      %s32 = sadd.s32 1, %s25
      %p33 = scmp.ge.s32.totalorder %s32, 1
      %s34 = scalar_select %p33, 0, %s32
      %s35 = sadd.s32 1, %s24
      %s36 = scalar_select %p33, %s35, %s24
      %p37 = scmp.ge.s32.totalorder %s36, 2
      %s38 = scalar_select %p37, 0, %s36
      %s39 = sadd.s32 1, %s23
      %s40 = scalar_select %p37, %s39, %s23
      %p41 = scmp.ge.s32.totalorder %s40, 1
      %s42 = scalar_select %p41, 0, %s40
      %s43 = ssub.s32 %s23, %s42
      %s44 = ssub.s32 %s25, %s34
      %s45 = sor.u32 %s43, %s44
      %p46 = scmp.eq.s32.totalorder %s45, 0
      %s48 = sadd.s32 %s47, 1
      %s49 = scalar_select %p46, %s47, %s48
      %p52 = pneg %p46
      %p53 = scmp.eq.s32.totalorder %s16, 1
      %p54 = por %p52, %p53
      %p55 = scmp.ne.s32.totalorder %s47, %s50
      %p56 = scmp.eq.s32.totalorder %s16, 0
      %p57 = por %p55, %p56
      %p58 = scmp.ne.s32.totalorder %s47, %s50
      %p59 = scmp.eq.s32.totalorder %s21, 1
      %p60 = por %p58, %p59
      %p61 = scmp.ne.s32.totalorder %s50, %s51
      %p62 = scmp.eq.s32.totalorder %s21, 0
      %p63 = por %p61, %p62
      %p64 = scmp.ne.s32.totalorder %s50, %s51
      %p65 = scmp.eq.s32.totalorder %s22, 1
      %p66 = por %p64, %p65
      %p68 = scmp.ne.s32.totalorder %s51, %s67
      %p69 = scmp.eq.s32.totalorder %s22, 0
      %p70 = por %p68, %p69
      %s71 = ssub.s32 %s25, %s34
      %s72 = ssub.s32 %s24, %s38
      %s73 = sor.u32 %s71, %s72
      %p74 = scmp.eq.s32.totalorder %s73, 0
      %s76 = sadd.s32 %s75, 1
      %s77 = scalar_select %p74, %s75, %s76
      %p80 = pneg %p74
      %p81 = scmp.eq.s32.totalorder %s16, 1
      %p82 = por %p80, %p81
      %p83 = scmp.ne.s32.totalorder %s75, %s78
      %p84 = scmp.eq.s32.totalorder %s16, 0
      %p85 = por %p83, %p84
      %p86 = scmp.ne.s32.totalorder %s75, %s78
      %p87 = scmp.eq.s32.totalorder %s21, 1
      %p88 = por %p86, %p87
      %p89 = scmp.ne.s32.totalorder %s78, %s79
      %p90 = scmp.eq.s32.totalorder %s21, 0
      %p91 = por %p89, %p90
      %p92 = scmp.ne.s32.totalorder %s78, %s79
      %p93 = scmp.eq.s32.totalorder %s22, 1
      %p94 = por %p92, %p93
      %p96 = scmp.ne.s32.totalorder %s79, %s95
      %p97 = scmp.eq.s32.totalorder %s22, 0
      %p98 = por %p96, %p97
      %s99 = ssub.s32 %s24, %s38
      %p100 = scmp.eq.s32.totalorder %s99, 0
      %s102 = sadd.s32 %s101, 1
      %s103 = scalar_select %p100, %s101, %s102
      %p106 = pneg %p100
      %p107 = scmp.eq.s32.totalorder %s16, 1
      %p108 = por %p106, %p107
      %p109 = scmp.ne.s32.totalorder %s101, %s104
      %p110 = scmp.eq.s32.totalorder %s16, 0
      %p111 = por %p109, %p110
      %p112 = scmp.ne.s32.totalorder %s101, %s104
      %p113 = scmp.eq.s32.totalorder %s21, 1
      %p114 = por %p112, %p113
      %p115 = scmp.ne.s32.totalorder %s104, %s105
      %p116 = scmp.eq.s32.totalorder %s21, 0
      %p117 = por %p115, %p116
      %p118 = scmp.ne.s32.totalorder %s104, %s105
      %p119 = scmp.eq.s32.totalorder %s22, 1
      %p120 = por %p118, %p119
      %p122 = scmp.ne.s32.totalorder %s105, %s121
      %p123 = scmp.eq.s32.totalorder %s22, 0
      %p124 = por %p122, %p123
      %s125 = ssub.s32 %s23, %s42
      %s126 = ssub.s32 %s24, %s38
      %s127 = sor.u32 %s125, %s126
      %p128 = scmp.eq.s32.totalorder %s127, 0
      %s130 = sadd.s32 %s129, 1
      %s131 = scalar_select %p128, %s129, %s130
      %p134 = pneg %p128
      %p135 = scmp.eq.s32.totalorder %s16, 1
      %p136 = por %p134, %p135
      %p137 = scmp.ne.s32.totalorder %s129, %s132
      %p138 = scmp.eq.s32.totalorder %s16, 0
      %p139 = por %p137, %p138
      %p140 = scmp.ne.s32.totalorder %s129, %s132
      %p141 = scmp.eq.s32.totalorder %s21, 1
      %p142 = por %p140, %p141
      %p143 = scmp.ne.s32.totalorder %s132, %s133
      %p144 = scmp.eq.s32.totalorder %s21, 0
      %p145 = por %p143, %p144
      %p146 = scmp.ne.s32.totalorder %s132, %s133
      %p147 = scmp.eq.s32.totalorder %s22, 1
      %p148 = por %p146, %p147
      %p150 = scmp.ne.s32.totalorder %s133, %s149
      %p151 = scmp.eq.s32.totalorder %s22, 0
      %p152 = por %p150, %p151
      %p153 = scmp.le.s32.totalorder 1, %s16
      %p154 = scmp.lt.s32.totalorder %s16, 3
      %p155 = pnand %p153, %p154
      %p156 = pneg %p155
      // Predicated region
      $region9: #{tpu_custom_call.1} parent=5 // pred_check
        _
      $region10: #{tpu_custom_call.1} parent=5 // pred_check_branch
        %158 = sbr.rel (%p155) target = $region12
      $region11: #{tpu_custom_call.1} parent=5 // pred_region
        %s159 = ssub.s32 %s16, 1
        // Predicated region
        $region13: #{tpu_custom_call.1} parent=11 // pred_check
          %p160 = pneg %p63
        $region14: #{tpu_custom_call.1} parent=11 // pred_check_branch
          %162 = sbr.rel (%p160) target = $region16
        $region15: #{tpu_custom_call.1} parent=11 // pred_region
          %s164 = ssub.s32 128, 128
          %165 = vsyncadd [#allocation3], %s164
          %s166 = sadd.s32 %s28, %s26
          %s167 = smul.addr %s166, 128
          %s168 = scalar_lea.hbm %s0, %s167
          %s170 = sshll.u32 [#allocation2], 4
          %s171 = int_to_ptr.vmem [resolvable:$true] %s170
          %173 = dma.hbm_to_vmem [thread:$0]  %s168, 128, %s171, [#allocation3]
        $region16: #{tpu_custom_call.1} parent=11 // pred_fallthru
          _
      $region12: #{tpu_custom_call.1} parent=5 // pred_fallthru
        _
      %p174 = scmp.lt.s32.totalorder %s16, 2
      // Predicated region
      $region17: #{tpu_custom_call.1} parent=5 // pred_check
        %p175 = pneg %p174
      $region18: #{tpu_custom_call.1} parent=5 // pred_check_branch
        %177 = sbr.rel (%p175) target = $region20
      $region19: #{tpu_custom_call.1} parent=5 // pred_region
        // Predicated region
        $region21: #{tpu_custom_call.1} parent=19 // pred_check
          %p178 = pneg %p85
        $region22: #{tpu_custom_call.1} parent=19 // pred_check_branch
          %180 = sbr.rel (%p178) target = $region24
        $region23: #{tpu_custom_call.1} parent=19 // pred_region
          %s181 = sand.u32 %s75, 1
          %s182 = scalar_lea.sflag [#allocation6], %s181
          %s183 = sand.u32 %s75, 1
          %s184 = smul.addr %s183, 32
          %s185 = scalar_lea.vmem [#allocation5], %s184
          %s186 = smul.u32 4, %s25
          %s188 = ssub.s32 512, 512
          %189 = vsyncadd %s182, %s188
          %s190 = smul.addr %s186, 2
          %s191 = sadd.s32 %s24, %s190
          %s192 = smul.addr %s191, 128
          %s193 = scalar_lea.hbm %s1, %s192
          %s194 = sshll.u32 %s185, 4
          %s195 = int_to_ptr.vmem [resolvable:$true] %s194
          %200 = dma.hbm_to_vmem [thread:$0]  %s193, 512, %s195, %s182, 256, 128, 8
        $region24: #{tpu_custom_call.1} parent=19 // pred_fallthru
          _
        // Predicated region
        $region25: #{tpu_custom_call.1} parent=19 // pred_check
          %p201 = pneg %p111
        $region26: #{tpu_custom_call.1} parent=19 // pred_check_branch
          %203 = sbr.rel (%p201) target = $region28
        $region27: #{tpu_custom_call.1} parent=19 // pred_region
          %p204 = scmp.lt.s32.totalorder %s24, 1
          %s205 = scalar_select %p204, %s24, 1
          %s206 = scalar_lea.vmem %s2, %s205
        $region28: #{tpu_custom_call.1} parent=19 // pred_fallthru
          _
      $region20: #{tpu_custom_call.1} parent=5 // pred_fallthru
        _
      %p207 = scmp.le.s32.totalorder 1, %s16
      %p208 = scmp.lt.s32.totalorder %s16, 3
      %p209 = pnand %p207, %p208
      %p210 = pneg %p209
      // Predicated region
      $region29: #{tpu_custom_call.1} parent=5 // pred_check
        _
      $region30: #{tpu_custom_call.1} parent=5 // pred_check_branch
        %212 = sbr.rel (%p209) target = $region32
      $region31: #{tpu_custom_call.1} parent=5 // pred_region
        %s213 = ssub.s32 %s16, 1
        // Predicated region
        $region33: #{tpu_custom_call.1} parent=31 // pred_check
          %p214 = pneg %p63
        $region34: #{tpu_custom_call.1} parent=31 // pred_check_branch
          %216 = sbr.rel (%p214) target = $region36
        $region35: #{tpu_custom_call.1} parent=31 // pred_region
          %217 = dma.done [#allocation3], 128
        $region36: #{tpu_custom_call.1} parent=31 // pred_fallthru
          _
        %s218 = sand.u32 %s78, 1
        %s219 = scalar_lea.sflag [#allocation6], %s218
        %s220 = sand.u32 %s78, 1
        %s221 = smul.addr %s220, 32
        %s222 = scalar_lea.vmem [#allocation5], %s221
        // Predicated region
        $region37: #{tpu_custom_call.1} parent=31 // pred_check
          %p223 = pneg %p91
        $region38: #{tpu_custom_call.1} parent=31 // pred_check_branch
          %225 = sbr.rel (%p223) target = $region40
        $region39: #{tpu_custom_call.1} parent=31 // pred_region
          %226 = dma.done %s219, 512
        $region40: #{tpu_custom_call.1} parent=31 // pred_fallthru
          _
        %p227 = pneg %p63
        %p228 = pneg %p60
        %s229 = sand.u32 %s78, 1
        %s230 = scalar_lea.sflag [#allocation6], %s229
        %s231 = sand.u32 %s78, 1
        %s232 = smul.addr %s231, 32
        %s233 = scalar_lea.vmem [#allocation5], %s232
        %p234 = pneg %p91
        %p235 = pneg %p88
        %p236 = scmp.lt.s32.totalorder %s27, 1
        %s237 = scalar_select %p236, %s27, 1
        %s238 = scalar_lea.vmem %s2, %s237
        %p239 = pneg %p117
        %p240 = pneg %p114
        %p241 = pneg %p145
        %p242 = pneg %p142
        %s243 = sand.u32 %s132, 1
        %s244 = scalar_lea.sflag [#allocation4], %s243
        %s245 = sand.u32 %s132, 1
        %s246 = smul.addr %s245, 8
        %s247 = scalar_lea.vmem [#allocation7], %s246
        %s248 = smul.u32 4, %s28
        %p249 = scmp.lt.s32.totalorder %s27, 1
        %s250 = scalar_select %p249, %s27, 1
        %s251 = scalar_lea.vmem %s2, %s250
        %p253 = scmp.eq.s32.totalorder %s28, 0
        // Predicated region
        $region41: #{tpu_custom_call.1} parent=31 // pred_check
          %p254 = pneg %p253
        $region42: #{tpu_custom_call.1} parent=31 // pred_check_branch
          %256 = sbr.rel (%p254) target = $region44
        $region43: #{tpu_custom_call.1} parent=31 // pred_region
          %257 = vst [vmem:[%s247] sm:$0xff] 0.0
        $region44: #{tpu_custom_call.1} parent=31 // pred_fallthru
          _
        %v258 = vld [vmem:[%s247] sm:$0xff]
        %v259 = vld [vmem:[#allocation2] sm:$0xff]
        %v260 = vpack.c.bf16 %v259, %v259
        %v261 = vld [vmem:[%s222] sm:$0xff]
        %v262 = vld [vmem:[%s222 + $0x8] sm:$0xff]
        %v263 = vld [vmem:[%s222 + $0x10] sm:$0xff]
        %v264 = vld [vmem:[%s222 + $0x18] sm:$0xff]
        %v265 = vpack.c.bf16 %v262, %v261
        %v266 = vpack.c.bf16 %v264, %v263
        %vm267 = vcmask 261120
        %v269 = vsel %vm267, %v260, 0
        %271 = vmatprep.subr.bf16.mxu0 0
        %272 = vmatpush1.bf16.msra.mxu0 0
        %273 = vmatprep.subr.bf16.mxu0 0
        %274 = vmatpush1.bf16.msra.mxu0 0
        %275 = vmatprep.subr.bf16.mxu0 0
        %276 = vmatpush1.bf16.msra.mxu0 0
        %277 = vmatprep.subr.bf16.mxu0 0
        %278 = vmatpush1.bf16.msra.mxu0 0
        %279 = vmatprep.subr.bf16.mxu0 0
        %280 = vmatpush1.bf16.msra.mxu0 0
        %281 = vmatprep.subr.bf16.mxu0 0
        %282 = vmatpush1.bf16.msra.mxu0 0
        %283 = vmatprep.subr.bf16.mxu0 0
        %284 = vmatpush1.bf16.msra.mxu0 %v266
        %285 = vmatprep.subr.bf16.mxu0 0
        %286 = vmatpush1.bf16.msra.mxu0 %v265
        %287 = vmatprep.subr.bf16.mxu0 0
        %288 = vmatpush2.bf16.msra.mxu0 0
        %289 = vmatprep.subr.bf16.mxu0 0
        %290 = vmatpush2.bf16.msra.mxu0 0
        %291 = vmatprep.subr.bf16.mxu0 0
        %292 = vmatpush2.bf16.msra.mxu0 0
        %293 = vmatprep.subr.bf16.mxu0 0
        %294 = vmatpush2.bf16.msra.mxu0 0
        %295 = vmatprep.subr.bf16.mxu0 0
        %296 = vmatpush2.bf16.msra.mxu0 0
        %297 = vmatprep.subr.bf16.mxu0 0
        %298 = vmatpush2.bf16.msra.mxu0 0
        %299 = vmatprep.subr.bf16.mxu0 0
        %300 = vmatpush2.bf16.msra.mxu0 0
        %301 = vmatprep.subr.bf16.mxu0 0
        %302 = vmatpush2.bf16.msra.mxu0 0
        %303 = vmatprep.mubr.bf16.mxu0 0
        %304 = vmatmul.mubr.bf16.gmra.mxu0 %v269
        %v305 = vpop.f32.mrf.mxu0
        %v306 = vadd.f32 0.0, %v305
        %v307 = vpop.f32.mrf.mxu0
        %v308 = vpop.f32.mrf.mxu0
        %v309 = vpop.f32.mrf.mxu0
        %310 = vdwg.mxu0
        %v311 = vadd.f32 %v258, %v306
        %312 = vst [vmem:[%s247] sm:$0xff] %v311
        // Predicated region
        $region45: #{tpu_custom_call.1} parent=31 // pred_check
          %p313 = pneg %p253
        $region46: #{tpu_custom_call.1} parent=31 // pred_check_branch
          %315 = sbr.rel (%p313) target = $region48
        $region47: #{tpu_custom_call.1} parent=31 // pred_region
          %v316 = vld [vmem:[%s247] sm:$0xff]
          %v317 = vmul.f32 %v316, 0.17677669
          %v318 = vld [vmem:[%s251] sm:$0x1]
          %v320 = vlaneseq
          %v321 = vshrl.u32 %v320, 7
          %v322 = vsub.s32 0, %v321
          %v323 = vrot.slane %v318, %v322
          %v325 = vadd.f32 %v317, %v323
          %326 = vst [vmem:[%s247] sm:$0xff] %v325
        $region48: #{tpu_custom_call.1} parent=31 // pred_fallthru
          _
        %s327 = sand.u32 %s132, 1
        %s328 = scalar_lea.sflag [#allocation4], %s327
        %s329 = sand.u32 %s132, 1
        %s330 = smul.addr %s329, 8
        %s331 = scalar_lea.vmem [#allocation7], %s330
        // Predicated region
        $region49: #{tpu_custom_call.1} parent=31 // pred_check
          %p332 = pneg %p142
        $region50: #{tpu_custom_call.1} parent=31 // pred_check_branch
          %334 = sbr.rel (%p332) target = $region52
        $region51: #{tpu_custom_call.1} parent=31 // pred_region
          %s336 = ssub.s32 128, 128
          %337 = vsyncadd %s328, %s336
          %s338 = smul.addr %s26, 2
          %s339 = sadd.s32 %s27, %s338
          %s340 = smul.addr %s339, 128
          %s341 = scalar_lea.hbm %s3, %s340
          %s343 = sshll.u32 %s331, 4
          %s344 = int_to_ptr.vmem [resolvable:$true] %s343
          %346 = dma.vmem_to_hbm [thread:$0]  %s344, 128, %s341, %s328
        $region52: #{tpu_custom_call.1} parent=31 // pred_fallthru
          _
      $region32: #{tpu_custom_call.1} parent=5 // pred_fallthru
        _
      %p347 = scmp.le.s32.totalorder 2, %s16
      // Predicated region
      $region53: #{tpu_custom_call.1} parent=5 // pred_check
        %p348 = pneg %p347
      $region54: #{tpu_custom_call.1} parent=5 // pred_check_branch
        %350 = sbr.rel (%p348) target = $region56
      $region55: #{tpu_custom_call.1} parent=5 // pred_region
        %s351 = ssub.s32 %s16, 2
        // Predicated region
        $region57: #{tpu_custom_call.1} parent=55 // pred_check
          %p352 = pneg %p148
        $region58: #{tpu_custom_call.1} parent=55 // pred_check_branch
          %354 = sbr.rel (%p352) target = $region60
        $region59: #{tpu_custom_call.1} parent=55 // pred_region
          %s355 = sand.u32 %s133, 1
          %s356 = scalar_lea.sflag [#allocation4], %s355
          %s357 = sand.u32 %s133, 1
          %s358 = smul.addr %s357, 8
          %s359 = scalar_lea.vmem [#allocation7], %s358
          %360 = dma.done %s356, 128
        $region60: #{tpu_custom_call.1} parent=55 // pred_fallthru
          _
      $region56: #{tpu_custom_call.1} parent=5 // pred_fallthru
        _
    $region6: #{tpu_custom_call.1} parent=1 // loop_footer
      %s20 = sadd.s32 1, %s16
    $region7: #{tpu_custom_call.1} parent=1 // loop_footer_branch
      %15 = sbr.rel target = $region3
    $region8: #{tpu_custom_call.1} parent=1 // loop_exit
      _
    %361 = vsyncpa [#allocation3], 1
    %s362 = scalar_lea.sflag [#allocation3], 1
    %363 = vsyncpa %s362, 1
    %364 = vsyncpa [#allocation6], 1
    %s365 = scalar_lea.sflag [#allocation6], 1
    %366 = vsyncpa %s365, 1
    %367 = vsyncpa [#allocation4], 1
    %s368 = scalar_lea.sflag [#allocation4], 1
    %369 = vsyncpa %s368, 1

</llo_original>
